<compile_context>
chip_gen: v5e
topology: v5e:2x2
jax: 0.10.0
libtpu: 0.0.40
codegen_flags: <defaults>
</compile_context>

<pallas_src>
import jax
import jax.numpy as jnp
from jax.experimental import pallas as pl
from jax.experimental.pallas import tpu as pltpu


def _onehot2d_attention_kernel(s_ref, wsT_ref, projT_ref, va_ref, img_ref, out_ref):
    # s_ref    : (1, D, 1)  decoder state for this grid step, as a column
    # wsT_ref  : (H, D)     Ws transposed
    # projT_ref: (H, N)     cached image/one-hot projection, transposed (lane-dense in N)
    # va_ref   : (1, H)     Va as a row
    # img_ref  : (N, C)     flattened image features
    # out_ref  : (1, 1, C)  u_t for this grid step

    # equation 8 (transposed): Ws s_t as an (H,1) column, lane-broadcast over the N positions
    ws_col = jnp.dot(wsT_ref[...], s_ref[0], preferred_element_type=jnp.float32)   # (H, 1)
    eq8T = projT_ref[...] + ws_col                                                  # (H, N)

    # equation 6, lane-dense: Va^T tanh(eq8) -> one score per position, (1, N)
    scores = jnp.dot(va_ref[...], jnp.tanh(eq8T), preferred_element_type=jnp.float32)

    # softmax over the N positions (lane reduces on a (1, N) row)
    m = jnp.max(scores, axis=-1, keepdims=True)
    e = jnp.exp(scores - m)
    inv = pl.reciprocal(jnp.sum(e, axis=-1, keepdims=True), approx=True)
    attn = e * inv                                                                   # (1, N)

    # u_t = attention-weighted sum of image features, as an MXU contraction over N
    out_ref[0] = jnp.dot(attn, img_ref[...], preferred_element_type=jnp.float32)     # (1, C)


def onehot2d_attention(s, img_enc, onehot_h, onehot_v, params):
    """Forward pass of OneHot2DAttention for B decoder states.

    s        : (B, D)  decoder hidden states
    img_enc  : (N, C)  flattened image features (N = I*J, channels-last)
    onehot_h : (N, I)  one-hot of each position's first spatial index
    onehot_v : (N, J)  one-hot of each position's second spatial index
    Weights are stored as (in_features, out_features), i.e. already transposed vs. nn.Linear.
    Returns u_t of shape (B, C).
    """
    B, D = s.shape
    N, C = img_enc.shape
    H = params["Ws"].shape[1]

    # ---- project_img_features: cached, per-step-invariant, computed OUTSIDE the kernel ----
    proj = (img_enc @ params["Wf1_w"] + params["Wf1_b"]
            + onehot_h @ params["Wf2_w"] + params["Wf2_b"]
            + onehot_v @ params["Wf3_w"] + params["Wf3_b"])          # (N, H)
    projT = proj.T                                                    # (H, N)  lane-dense in N
    wsT = params["Ws"].T                                              # (H, D)
    va_row = params["Va"].T                                           # (1, H)
    s_col = s[:, :, None]                                             # (B, D, 1)

    out = pl.pallas_call(
        _onehot2d_attention_kernel,
        out_shape=jax.ShapeDtypeStruct((B, 1, C), jnp.float32),
        grid_spec=pltpu.PrefetchScalarGridSpec(
            num_scalar_prefetch=0,
            grid=(B,),
            in_specs=[
                pl.BlockSpec((1, D, 1), lambda b: (b, 0, 0)),   # per-step decoder state
                pl.BlockSpec((H, D), lambda b: (0, 0)),         # WsT (shared)
                pl.BlockSpec((H, N), lambda b: (0, 0)),         # projT (shared, cached)
                pl.BlockSpec((1, H), lambda b: (0, 0)),         # Va row (shared)
                pl.BlockSpec((N, C), lambda b: (0, 0)),         # img features (shared)
            ],
            out_specs=pl.BlockSpec((1, 1, C), lambda b: (b, 0, 0)),
        ),
        compiler_params=pltpu.CompilerParams(
            dimension_semantics=("parallel",)),                  # batched axis -> both TCs on v7x
    )(s_col, wsT, projT, va_row, img_enc)
    return out[:, 0, :]                                          # (B, C)


if __name__ == "__main__":
    # small shapes implied by the module's __init__
    D, H, I, J, C = 32, 32, 16, 16, 4          # decoder_hidden, hidden, width, height, channels
    B = 2                                      # batch of decoder states (beam / batch dim)
    N = I * J

    key = jax.random.PRNGKey(0)
    ks = jax.random.split(key, 10)

    params = {
        "Ws":    0.1 * jax.random.normal(ks[0], (D, H), jnp.float32),   # Linear(D,H,bias=False)
        "Wf1_w": 0.1 * jax.random.normal(ks[1], (C, H), jnp.float32),   # Linear(C,H)
        "Wf1_b": 0.1 * jax.random.normal(ks[2], (1, H), jnp.float32),
        "Wf2_w": 0.1 * jax.random.normal(ks[3], (I, H), jnp.float32),   # Linear(width,H)
        "Wf2_b": 0.1 * jax.random.normal(ks[4], (1, H), jnp.float32),
        "Wf3_w": 0.1 * jax.random.normal(ks[5], (J, H), jnp.float32),   # Linear(height,H)
        "Wf3_b": 0.1 * jax.random.normal(ks[6], (1, H), jnp.float32),
        "Va":    0.1 * jax.random.normal(ks[7], (H, 1), jnp.float32),   # Linear(H,1,bias=False)
    }

    s = jax.random.normal(ks[8], (B, D), jnp.float32)                   # decoder_hidden_state_t
    img_nchw = jax.random.normal(ks[9], (1, C, I, J), jnp.float32)      # PyTorch NCHW feature map
    img_enc = jnp.transpose(img_nchw[0], (1, 2, 0)).reshape(N, C)       # (I*J, C)

    # NOTE: with the NCHW->(I,J,C) flatten used here, p // J indexes the first spatial axis.
    # I == J in this harness so the Wf_2/Wf_3 assignment is numerically invisible; verify the
    # width/height mapping against the PyTorch caller if I != J.
    idx_i = jnp.arange(N) // J
    idx_j = jnp.arange(N) % J
    onehot_h = jax.nn.one_hot(idx_i, I, dtype=jnp.float32)              # (N, I) -> Wf_2
    onehot_v = jax.nn.one_hot(idx_j, J, dtype=jnp.float32)              # (N, J) -> Wf_3

    run = jax.jit(onehot2d_attention)
    u_t = run(s, img_enc, onehot_h, onehot_v, params)
    u_t = jax.block_until_ready(u_t)
    assert u_t.shape == (B, C)

    # plain-JAX reference (same math) for a correctness sanity check
    proj = (img_enc @ params["Wf1_w"] + params["Wf1_b"]
            + onehot_h @ params["Wf2_w"] + params["Wf2_b"]
            + onehot_v @ params["Wf3_w"] + params["Wf3_b"])             # (N, H)
    eq8 = (s @ params["Ws"])[:, None, :] + proj[None]                    # (B, N, H)
    eq6 = jnp.einsum("bnh,ho->bn", jnp.tanh(eq8), params["Va"])          # (B, N)
    attn = jax.nn.softmax(eq6, axis=-1)
    ref = jnp.einsum("bn,nc->bc", attn, img_enc)                         # (B, C)
    # slightly loose tolerance: approx reciprocal in the in-kernel softmax denominator
    assert jnp.allclose(u_t, ref, atol=1e-4, rtol=1e-3)

    print("KERNEL_OK")
</pallas_src>

<mosaic_0001>
module attributes {stable_mosaic.version = 11 : i64} {
  func.func @_onehot2d_attention_kernel(%arg0: i32, %arg1: memref<1x32x1xf32, #tpu.memory_space<vmem>>, %arg2: memref<32x32xf32, #tpu.memory_space<vmem>>, %arg3: memref<32x256xf32, #tpu.memory_space<vmem>>, %arg4: memref<1x32xf32, #tpu.memory_space<vmem>>, %arg5: memref<256x4xf32, #tpu.memory_space<vmem>>, %arg6: memref<1x1x4xf32, #tpu.memory_space<vmem>>) attributes {dimension_semantics = [#tpu.dimension_semantics<parallel>], iteration_bounds = array<i64: 2>, scalar_prefetch = 0 : i64, scratch_operands = 0 : i64, tpu.core_type = #tpu.core_type<tc>, window_params = [{transform_indices = @transform_0, window_bounds = array<i64: 1, 32, 1>}, {pipeline_mode = #tpu.pipeline_mode<synchronous>, transform_indices = @transform_1, window_bounds = array<i64: 32, 32>}, {pipeline_mode = #tpu.pipeline_mode<synchronous>, transform_indices = @transform_2, window_bounds = array<i64: 32, 256>}, {pipeline_mode = #tpu.pipeline_mode<synchronous>, transform_indices = @transform_3, window_bounds = array<i64: 1, 32>}, {pipeline_mode = #tpu.pipeline_mode<synchronous>, transform_indices = @transform_4, window_bounds = array<i64: 256, 4>}, {transform_indices = @transform_5, window_bounds = array<i64: 1, 1, 4>}]} {
    %c0 = arith.constant 0 : index
    %c0_0 = arith.constant 0 : index
    %0 = vector.load %arg2[%c0, %c0_0] : memref<32x32xf32, #tpu.memory_space<vmem>>, vector<32x32xf32>
    %c0_1 = arith.constant 0 : index
    %c0_2 = arith.constant 0 : index
    %c0_3 = arith.constant 0 : index
    %1 = vector.load %arg1[%c0_1, %c0_2, %c0_3] : memref<1x32x1xf32, #tpu.memory_space<vmem>>, vector<1x32x1xf32>
    %2 = vector.shape_cast %1 : vector<1x32x1xf32> to vector<32x1xf32>
    %cst = arith.constant dense<0.000000e+00> : vector<32x1xf32>
    %3 = tpu.matmul %0, %2, %cst {dimension_numbers = #tpu.dot_dimension_numbers<[1], [0], [0], [1], [0, 0, 1, 1], [], []>} : vector<32x32xf32>, vector<32x1xf32>, vector<32x1xf32> -> vector<32x1xf32>
    %c0_4 = arith.constant 0 : index
    %c0_5 = arith.constant 0 : index
    %4 = vector.load %arg3[%c0_4, %c0_5] : memref<32x256xf32, #tpu.memory_space<vmem>>, vector<32x256xf32>
    %5 = vector.broadcast %3 : vector<32x1xf32> to vector<32x256xf32>
    %6 = arith.addf %4, %5 : vector<32x256xf32>
    %c0_6 = arith.constant 0 : index
    %c0_7 = arith.constant 0 : index
    %7 = vector.load %arg4[%c0_6, %c0_7] : memref<1x32xf32, #tpu.memory_space<vmem>>, vector<1x32xf32>
    %8 = math.tanh %6 : vector<32x256xf32>
    %cst_8 = arith.constant dense<0.000000e+00> : vector<1x256xf32>
    %9 = tpu.matmul %7, %8, %cst_8 {dimension_numbers = #tpu.dot_dimension_numbers<[1], [0], [0], [1], [0, 0, 1, 1], [], []>} : vector<1x32xf32>, vector<32x256xf32>, vector<1x256xf32> -> vector<1x256xf32>
    %cst_9 = arith.constant dense<0xFF800000> : vector<1xf32>
    %10 = vector.multi_reduction <maximumf>, %9, %cst_9 [1] : vector<1x256xf32> to vector<1xf32>
    %11 = vector.shape_cast %10 : vector<1xf32> to vector<1x1xf32>
    %12 = vector.broadcast %11 : vector<1x1xf32> to vector<1x256xf32>
    %13 = arith.subf %9, %12 : vector<1x256xf32>
    %14 = math.exp %13 : vector<1x256xf32>
    %cst_10 = arith.constant dense<0.000000e+00> : vector<1xf32>
    %15 = vector.multi_reduction <add>, %14, %cst_10 [1] : vector<1x256xf32> to vector<1xf32>
    %16 = vector.shape_cast %15 : vector<1xf32> to vector<1x1xf32>
    %17 = tpu.reciprocal %16 {approx = true} : vector<1x1xf32> -> vector<1x1xf32>
    %18 = vector.broadcast %17 : vector<1x1xf32> to vector<1x256xf32>
    %19 = arith.mulf %14, %18 : vector<1x256xf32>
    %c0_11 = arith.constant 0 : index
    %c0_12 = arith.constant 0 : index
    %20 = vector.load %arg5[%c0_11, %c0_12] : memref<256x4xf32, #tpu.memory_space<vmem>>, vector<256x4xf32>
    %cst_13 = arith.constant dense<0.000000e+00> : vector<1x4xf32>
    %21 = tpu.matmul %19, %20, %cst_13 {dimension_numbers = #tpu.dot_dimension_numbers<[1], [0], [0], [1], [0, 0, 1, 1], [], []>} : vector<1x256xf32>, vector<256x4xf32>, vector<1x4xf32> -> vector<1x4xf32>
    %c0_14 = arith.constant 0 : index
    %c0_15 = arith.constant 0 : index
    %c0_16 = arith.constant 0 : index
    %22 = vector.load %arg6[%c0_14, %c0_15, %c0_16] : memref<1x1x4xf32, #tpu.memory_space<vmem>>, vector<1x1x4xf32>
    %23 = vector.shape_cast %22 : vector<1x1x4xf32> to vector<1x4xf32>
    %24 = vector.shape_cast %21 : vector<1x4xf32> to vector<1x1x4xf32>
    tpu.vector_store %arg6[%c0_14, %c0_15, %c0_16], %24 {strides = array<i32>} : memref<1x1x4xf32, #tpu.memory_space<vmem>>, vector<1x1x4xf32>,
    return
  }
  func.func @transform_0(%arg0: i32) -> (i32, i32, i32) {
    %c0_i32 = arith.constant 0 : i32
    %c0_i32_0 = arith.constant 0 : i32
    %c0_i32_1 = arith.constant 0 : i32
    return %arg0, %c0_i32, %c0_i32_0 : i32, i32, i32
  }
  func.func @transform_1(%arg0: i32) -> (i32, i32) {
    %c0_i32 = arith.constant 0 : i32
    %c0_i32_0 = arith.constant 0 : i32
    %c0_i32_1 = arith.constant 0 : i32
    return %c0_i32, %c0_i32_0 : i32, i32
  }
  func.func @transform_2(%arg0: i32) -> (i32, i32) {
    %c0_i32 = arith.constant 0 : i32
    %c0_i32_0 = arith.constant 0 : i32
    %c0_i32_1 = arith.constant 0 : i32
    return %c0_i32, %c0_i32_0 : i32, i32
  }
  func.func @transform_3(%arg0: i32) -> (i32, i32) {
    %c0_i32 = arith.constant 0 : i32
    %c0_i32_0 = arith.constant 0 : i32
    %c0_i32_1 = arith.constant 0 : i32
    return %c0_i32, %c0_i32_0 : i32, i32
  }
  func.func @transform_4(%arg0: i32) -> (i32, i32) {
    %c0_i32 = arith.constant 0 : i32
    %c0_i32_0 = arith.constant 0 : i32
    %c0_i32_1 = arith.constant 0 : i32
    return %c0_i32, %c0_i32_0 : i32, i32
  }
  func.func @transform_5(%arg0: i32) -> (i32, i32, i32) {
    %c0_i32 = arith.constant 0 : i32
    %c0_i32_0 = arith.constant 0 : i32
    %c0_i32_1 = arith.constant 0 : i32
    return %arg0, %c0_i32, %c0_i32_0 : i32, i32, i32
  }
}

</mosaic_0001>

<llo_original>
// kernel: onehot2d_attention.1
$region0: #{onehot2d_attention.1}
  #allocation0 [shape = 'u32[]', space=smem, size = 0x4, offset = 0x4, fixed_abs, tag = 'smem constant byte address 0x4 - core index']
  #allocation1 [shape = 'u32[72,128]{1,0:T(1,128)}', space=vmem, size = 0x9000, scoped, tag = 'internal scratch']
  %s0 = inlined_call_operand.vmem [shape: f32[2,32,1], index: 0, kind: input, shape index: {}]
  %s1 = inlined_call_operand.vmem [shape: f32[32,32], index: 1, kind: input, shape index: {}]
  %s2 = inlined_call_operand.vmem [shape: f32[32,256], index: 2, kind: input, shape index: {}]
  %s3 = inlined_call_operand.vmem [shape: f32[1,32], index: 3, kind: input, shape index: {}]
  %s4 = inlined_call_operand.vmem [shape: f32[256,4], index: 4, kind: input, shape index: {}]
  %s5 = inlined_call_operand.hbm [shape: f32[2,1,4], index: 5, kind: output, shape index: {}]
  %s6 = sld [smem:[#allocation0]]
  $region53: #{onehot2d_attention.1} parent=0
    _
  %s8 = ssub.s32 1, %s6
  %s9 = scalar_select 0, %s8, %s6
  $region1: #{onehot2d_attention.1} parent=0
    #allocation2 [shape = 'u8[1024]{0}', space=vmem, size = 0x400, scoped, tag = 'output window, operand 0']
    #allocation3 [shape = 's32[2]{0}', space=sflag, size = 0x8, scoped, tag = 'scoped memory for onehot2d_attention.1']
    %10 = vsyncpa [#allocation3], 0
    %s11 = scalar_lea.sflag [#allocation3], 1
    %12 = vsyncpa %s11, 0
    loop: start=0, step=1, limit=4
    $region2: #{onehot2d_attention.1} parent=1 // loop_pre_header
      _
    $region3: #{onehot2d_attention.1} parent=1 // loop_header
      %s14 = sphi 0, %s18
      %p15 = scmp.ge.s32.totalorder %s14, 4
      %s24 = sphi 0, %s26
      %s27 = sphi 0, %s24
      %s28 = sphi 0, %s27
      %s44 = sphi 0, %s28
      %s48 = sphi 0, %s48
      %s50 = sphi 0, %s48
      %s51 = sphi 0, %s50
      %s65 = sphi 0, %s51
      %s69 = sphi 0, %s69
      %s71 = sphi 0, %s69
      %s72 = sphi 0, %s71
      %s86 = sphi 0, %s72
      %s90 = sphi 0, %s90
      %s92 = sphi 0, %s90
      %s93 = sphi 0, %s92
      %s107 = sphi 0, %s93
      %s111 = sphi 0, %s111
      %s113 = sphi 0, %s111
      %s114 = sphi 0, %s113
      %s128 = sphi 0, %s114
      %s134 = sphi 0, %s136
      %s137 = sphi 0, %s134
      %s138 = sphi 0, %s137
      %s154 = sphi 0, %s138
    $region4: #{onehot2d_attention.1} parent=1 // loop_header_branch
      %17 = sbr.rel (%p15) target = $region8
    $region5: #{onehot2d_attention.1} parent=1 // loop_body
      %s19 = ssub.s32 %s14, 1
      %s20 = ssub.s32 %s14, 2
      %s21 = sadd.s32 %s14, 1
      %s22 = ssub.s32 %s14, %s21
      %p23 = scmp.eq.s32.totalorder %s22, 0
      %s25 = sadd.s32 %s24, 1
      %s26 = scalar_select %p23, %s24, %s25
      %p29 = pneg %p23
      %p30 = scmp.eq.s32.totalorder %s14, 1
      %p31 = por %p29, %p30
      %p32 = scmp.ne.s32.totalorder %s24, %s27
      %p33 = scmp.eq.s32.totalorder %s14, 0
      %p34 = por %p32, %p33
      %p35 = scmp.ne.s32.totalorder %s24, %s27
      %p36 = scmp.eq.s32.totalorder %s19, 1
      %p37 = por %p35, %p36
      %p38 = scmp.ne.s32.totalorder %s27, %s28
      %p39 = scmp.eq.s32.totalorder %s19, 0
      %p40 = por %p38, %p39
      %p41 = scmp.ne.s32.totalorder %s27, %s28
      %p42 = scmp.eq.s32.totalorder %s20, 1
      %p43 = por %p41, %p42
      %p45 = scmp.ne.s32.totalorder %s28, %s44
      %p46 = scmp.eq.s32.totalorder %s20, 0
      %p47 = por %p45, %p46
      %s49 = sadd.s32 %s48, 1
      %p52 = scmp.eq.s32.totalorder %s14, 1
      %p53 = scmp.ne.s32.totalorder %s48, %s50
      %p54 = scmp.eq.s32.totalorder %s14, 0
      %p55 = por %p53, %p54
      %p56 = scmp.ne.s32.totalorder %s48, %s50
      %p57 = scmp.eq.s32.totalorder %s19, 1
      %p58 = por %p56, %p57
      %p59 = scmp.ne.s32.totalorder %s50, %s51
      %p60 = scmp.eq.s32.totalorder %s19, 0
      %p61 = por %p59, %p60
      %p62 = scmp.ne.s32.totalorder %s50, %s51
      %p63 = scmp.eq.s32.totalorder %s20, 1
      %p64 = por %p62, %p63
      %p66 = scmp.ne.s32.totalorder %s51, %s65
      %p67 = scmp.eq.s32.totalorder %s20, 0
      %p68 = por %p66, %p67
      %s70 = sadd.s32 %s69, 1
      %p73 = scmp.eq.s32.totalorder %s14, 1
      %p74 = scmp.ne.s32.totalorder %s69, %s71
      %p75 = scmp.eq.s32.totalorder %s14, 0
      %p76 = por %p74, %p75
      %p77 = scmp.ne.s32.totalorder %s69, %s71
      %p78 = scmp.eq.s32.totalorder %s19, 1
      %p79 = por %p77, %p78
      %p80 = scmp.ne.s32.totalorder %s71, %s72
      %p81 = scmp.eq.s32.totalorder %s19, 0
      %p82 = por %p80, %p81
      %p83 = scmp.ne.s32.totalorder %s71, %s72
      %p84 = scmp.eq.s32.totalorder %s20, 1
      %p85 = por %p83, %p84
      %p87 = scmp.ne.s32.totalorder %s72, %s86
      %p88 = scmp.eq.s32.totalorder %s20, 0
      %p89 = por %p87, %p88
      %s91 = sadd.s32 %s90, 1
      %p94 = scmp.eq.s32.totalorder %s14, 1
      %p95 = scmp.ne.s32.totalorder %s90, %s92
      %p96 = scmp.eq.s32.totalorder %s14, 0
      %p97 = por %p95, %p96
      %p98 = scmp.ne.s32.totalorder %s90, %s92
      %p99 = scmp.eq.s32.totalorder %s19, 1
      %p100 = por %p98, %p99
      %p101 = scmp.ne.s32.totalorder %s92, %s93
      %p102 = scmp.eq.s32.totalorder %s19, 0
      %p103 = por %p101, %p102
      %p104 = scmp.ne.s32.totalorder %s92, %s93
      %p105 = scmp.eq.s32.totalorder %s20, 1
      %p106 = por %p104, %p105
      %p108 = scmp.ne.s32.totalorder %s93, %s107
      %p109 = scmp.eq.s32.totalorder %s20, 0
      %p110 = por %p108, %p109
      %s112 = sadd.s32 %s111, 1
      %p115 = scmp.eq.s32.totalorder %s14, 1
      %p116 = scmp.ne.s32.totalorder %s111, %s113
      %p117 = scmp.eq.s32.totalorder %s14, 0
      %p118 = por %p116, %p117
      %p119 = scmp.ne.s32.totalorder %s111, %s113
      %p120 = scmp.eq.s32.totalorder %s19, 1
      %p121 = por %p119, %p120
      %p122 = scmp.ne.s32.totalorder %s113, %s114
      %p123 = scmp.eq.s32.totalorder %s19, 0
      %p124 = por %p122, %p123
      %p125 = scmp.ne.s32.totalorder %s113, %s114
      %p126 = scmp.eq.s32.totalorder %s20, 1
      %p127 = por %p125, %p126
      %p129 = scmp.ne.s32.totalorder %s114, %s128
      %p130 = scmp.eq.s32.totalorder %s20, 0
      %p131 = por %p129, %p130
      %s132 = ssub.s32 %s14, %s21
      %p133 = scmp.eq.s32.totalorder %s132, 0
      %s135 = sadd.s32 %s134, 1
      %s136 = scalar_select %p133, %s134, %s135
      %p139 = pneg %p133
      %p140 = scmp.eq.s32.totalorder %s14, 1
      %p141 = por %p139, %p140
      %p142 = scmp.ne.s32.totalorder %s134, %s137
      %p143 = scmp.eq.s32.totalorder %s14, 0
      %p144 = por %p142, %p143
      %p145 = scmp.ne.s32.totalorder %s134, %s137
      %p146 = scmp.eq.s32.totalorder %s19, 1
      %p147 = por %p145, %p146
      %p148 = scmp.ne.s32.totalorder %s137, %s138
      %p149 = scmp.eq.s32.totalorder %s19, 0
      %p150 = por %p148, %p149
      %p151 = scmp.ne.s32.totalorder %s137, %s138
      %p152 = scmp.eq.s32.totalorder %s20, 1
      %p153 = por %p151, %p152
      %p155 = scmp.ne.s32.totalorder %s138, %s154
      %p156 = scmp.eq.s32.totalorder %s20, 0
      %p157 = por %p155, %p156
      %p158 = scmp.le.s32.totalorder 1, %s14
      %p159 = scmp.lt.s32.totalorder %s14, 3
      %p160 = pnand %p158, %p159
      %p161 = pneg %p160
      // Predicated region
      $region9: #{onehot2d_attention.1} parent=5 // pred_check
        _
      $region10: #{onehot2d_attention.1} parent=5 // pred_check_branch
        %163 = sbr.rel (%p160) target = $region12
      $region11: #{onehot2d_attention.1} parent=5 // pred_region
        %s164 = ssub.s32 %s14, 1
        // Predicated region
        $region13: #{onehot2d_attention.1} parent=11 // pred_check
          %p165 = pneg %p61
        $region14: #{onehot2d_attention.1} parent=11 // pred_check_branch
          %167 = sbr.rel (%p165) target = $region16
        $region15: #{onehot2d_attention.1} parent=11 // pred_region
          _
        $region16: #{onehot2d_attention.1} parent=11 // pred_fallthru
          _
        // Predicated region
        $region17: #{onehot2d_attention.1} parent=11 // pred_check
          %p168 = pneg %p82
        $region18: #{onehot2d_attention.1} parent=11 // pred_check_branch
          %170 = sbr.rel (%p168) target = $region20
        $region19: #{onehot2d_attention.1} parent=11 // pred_region
          _
        $region20: #{onehot2d_attention.1} parent=11 // pred_fallthru
          _
        // Predicated region
        $region21: #{onehot2d_attention.1} parent=11 // pred_check
          %p171 = pneg %p103
        $region22: #{onehot2d_attention.1} parent=11 // pred_check_branch
          %173 = sbr.rel (%p171) target = $region24
        $region23: #{onehot2d_attention.1} parent=11 // pred_region
          _
        $region24: #{onehot2d_attention.1} parent=11 // pred_fallthru
          _
        // Predicated region
        $region25: #{onehot2d_attention.1} parent=11 // pred_check
          %p174 = pneg %p124
        $region26: #{onehot2d_attention.1} parent=11 // pred_check_branch
          %176 = sbr.rel (%p174) target = $region28
        $region27: #{onehot2d_attention.1} parent=11 // pred_region
          _
        $region28: #{onehot2d_attention.1} parent=11 // pred_fallthru
          _
      $region12: #{onehot2d_attention.1} parent=5 // pred_fallthru
        _
      %p177 = scmp.lt.s32.totalorder %s14, 2
      // Predicated region
      $region29: #{onehot2d_attention.1} parent=5 // pred_check
        %p178 = pneg %p177
      $region30: #{onehot2d_attention.1} parent=5 // pred_check_branch
        %180 = sbr.rel (%p178) target = $region32
      $region31: #{onehot2d_attention.1} parent=5 // pred_region
        // Predicated region
        $region33: #{onehot2d_attention.1} parent=31 // pred_check
          %p181 = pneg %p34
        $region34: #{onehot2d_attention.1} parent=31 // pred_check_branch
          %183 = sbr.rel (%p181) target = $region36
        $region35: #{onehot2d_attention.1} parent=31 // pred_region
          %p184 = scmp.lt.s32.totalorder %s14, 1
          %s185 = scalar_select %p184, %s14, 1
          %s186 = smul.addr %s185, 4
          %s187 = smul.addr %s186, 8
          %s188 = scalar_lea.vmem %s0, %s187
        $region36: #{onehot2d_attention.1} parent=31 // pred_fallthru
          _
      $region32: #{onehot2d_attention.1} parent=5 // pred_fallthru
        _
      %p189 = scmp.le.s32.totalorder 1, %s14
      %p190 = scmp.lt.s32.totalorder %s14, 3
      %p191 = pnand %p189, %p190
      %p192 = pneg %p191
      // Predicated region
      $region37: #{onehot2d_attention.1} parent=5 // pred_check
        _
      $region38: #{onehot2d_attention.1} parent=5 // pred_check_branch
        %194 = sbr.rel (%p191) target = $region40
      $region39: #{onehot2d_attention.1} parent=5 // pred_region
        %s195 = ssub.s32 %s14, 1
        %p196 = scmp.lt.s32.totalorder %s19, 1
        %s197 = scalar_select %p196, %s19, 1
        %s198 = smul.addr %s197, 4
        %s199 = smul.addr %s198, 8
        %s200 = scalar_lea.vmem %s0, %s199
        %p201 = pneg %p40
        %p202 = pneg %p37
        %p203 = pneg %p61
        %p204 = pneg %p58
        %p205 = pneg %p82
        %p206 = pneg %p79
        %p207 = pneg %p103
        %p208 = pneg %p100
        %p209 = pneg %p124
        %p210 = pneg %p121
        %p211 = pneg %p150
        %p212 = pneg %p147
        %s213 = sand.u32 %s137, 1
        %s214 = scalar_lea.sflag [#allocation3], %s213
        %s215 = sand.u32 %s137, 1
        %s216 = scalar_lea.vmem [#allocation2], %s215
        %p217 = scmp.lt.s32.totalorder %s19, 1
        %s218 = scalar_select %p217, %s19, 1
        %s219 = smul.addr %s218, 4
        %s220 = smul.addr %s219, 8
        %s221 = scalar_lea.vmem %s0, %s220
        %v222 = vld [vmem:[%s1] sm:$0xff]
        %v223 = vld [vmem:[%s1 + $0x8] sm:$0xff]
        %v224 = vld [vmem:[%s1 + $0x10] sm:$0xff]
        %v225 = vld [vmem:[%s1 + $0x18] sm:$0xff]
        %v226 = vld [vmem:[%s221] sm:$0xff]
        %v227 = vld [vmem:[%s221 + $0x8] sm:$0xff]
        %v228 = vld [vmem:[%s221 + $0x10] sm:$0xff]
        %v229 = vld [vmem:[%s221 + $0x18] sm:$0xff]
        %vm230 = vcmask 261120
        %v232 = vsel %vm230, %v222, 0
        %v235 = vsel %vm230, %v223, 0
        %v238 = vsel %vm230, %v224, 0
        %v241 = vsel %vm230, %v225, 0
        %243 = vmatpush.msra.mxu0 0.0
        %244 = vmatpush.msra.mxu0 0.0
        %245 = vmatpush.msra.mxu0 0.0
        %246 = vmatpush.msra.mxu0 0.0
        %247 = vmatpush.msra.mxu0 0.0
        %248 = vmatpush.msra.mxu0 0.0
        %249 = vmatpush.msra.mxu0 0.0
        %250 = vmatpush.msra.mxu0 0.0
        %251 = vmatpush.msra.mxu0 0.0
        %252 = vmatpush.msra.mxu0 0.0
        %253 = vmatpush.msra.mxu0 0.0
        %254 = vmatpush.msra.mxu0 0.0
        %255 = vmatpush.msra.mxu0 %v229
        %256 = vmatpush.msra.mxu0 %v228
        %257 = vmatpush.msra.mxu0 %v227
        %258 = vmatpush.msra.mxu0 %v226
        %259 = vmatmul.f32.gmra.mxu0 %v232
        %v260 = vpop.f32.mrf.mxu0
        %v261 = vadd.f32 0.0, %v260
        %262 = vmatmul.f32.gmra.mxu0 %v235
        %v263 = vpop.f32.mrf.mxu0
        %v264 = vadd.f32 0.0, %v263
        %265 = vmatmul.f32.gmra.mxu0 %v238
        %v266 = vpop.f32.mrf.mxu0
        %v267 = vadd.f32 0.0, %v266
        %268 = vmatmul.f32.gmra.mxu0 %v241
        %v269 = vpop.f32.mrf.mxu0
        %v270 = vadd.f32 0.0, %v269
        %271 = vdwg.mxu0
        %v272 = vld [vmem:[%s2] sm:$0xff]
        %v273 = vld [vmem:[%s2 + $0x8] sm:$0xff]
        %v274 = vld [vmem:[%s2 + $0x10] sm:$0xff]
        %v275 = vld [vmem:[%s2 + $0x18] sm:$0xff]
        %v276 = vld [vmem:[%s2 + $0x20] sm:$0xff]
        %v277 = vld [vmem:[%s2 + $0x28] sm:$0xff]
        %v278 = vld [vmem:[%s2 + $0x30] sm:$0xff]
        %v279 = vld [vmem:[%s2 + $0x38] sm:$0xff]
        %281 = vset.pattern.permute.xlu0 0
        %282 = vperm.xlu0 %281, %v261
        %v283 = vpop.permute.xlu0 %282
        %286 = vset.pattern.permute.xlu0 0
        %287 = vperm.xlu0 %286, %v264
        %v288 = vpop.permute.xlu0 %287
        %291 = vset.pattern.permute.xlu0 0
        %292 = vperm.xlu0 %291, %v267
        %v293 = vpop.permute.xlu0 %292
        %296 = vset.pattern.permute.xlu0 0
        %297 = vperm.xlu0 %296, %v270
        %v298 = vpop.permute.xlu0 %297
        %v300 = vadd.f32 %v272, %v283
        %v301 = vadd.f32 %v273, %v283
        %v302 = vadd.f32 %v274, %v288
        %v303 = vadd.f32 %v275, %v288
        %v304 = vadd.f32 %v276, %v293
        %v305 = vadd.f32 %v277, %v293
        %v306 = vadd.f32 %v278, %v298
        %v307 = vadd.f32 %v279, %v298
        %v308 = vld [vmem:[%s3] sm:$0x1]
        %v309 = vtanh.pop %v300
        %v310 = vtanh.pop %v301
        %v311 = vtanh.pop %v302
        %v312 = vtanh.pop %v303
        %v313 = vtanh.pop %v304
        %v314 = vtanh.pop %v305
        %v315 = vtanh.pop %v306
        %v316 = vtanh.pop %v307
        %v318 = vsel %vm230, %v308, 0
        %320 = vmatpush.msra.mxu0 0.0
        %321 = vmatpush.msra.mxu0 0.0
        %322 = vmatpush.msra.mxu0 0.0
        %323 = vmatpush.msra.mxu0 0.0
        %324 = vmatpush.msra.mxu0 0.0
        %325 = vmatpush.msra.mxu0 0.0
        %326 = vmatpush.msra.mxu0 0.0
        %327 = vmatpush.msra.mxu0 0.0
        %328 = vmatpush.msra.mxu0 0.0
        %329 = vmatpush.msra.mxu0 0.0
        %330 = vmatpush.msra.mxu0 0.0
        %331 = vmatpush.msra.mxu0 0.0
        %332 = vmatpush.msra.mxu0 %v315
        %333 = vmatpush.msra.mxu0 %v313
        %334 = vmatpush.msra.mxu0 %v311
        %335 = vmatpush.msra.mxu0 %v309
        %336 = vmatmul.f32.gmra.mxu0 %v318
        %v337 = vpop.f32.mrf.mxu0
        %v338 = vadd.f32 0.0, %v337
        %339 = vdwg.mxu0
        %340 = vmatpush.msra.mxu0 0.0
        %341 = vmatpush.msra.mxu0 0.0
        %342 = vmatpush.msra.mxu0 0.0
        %343 = vmatpush.msra.mxu0 0.0
        %344 = vmatpush.msra.mxu0 0.0
        %345 = vmatpush.msra.mxu0 0.0
        %346 = vmatpush.msra.mxu0 0.0
        %347 = vmatpush.msra.mxu0 0.0
        %348 = vmatpush.msra.mxu0 0.0
        %349 = vmatpush.msra.mxu0 0.0
        %350 = vmatpush.msra.mxu0 0.0
        %351 = vmatpush.msra.mxu0 0.0
        %352 = vmatpush.msra.mxu0 %v316
        %353 = vmatpush.msra.mxu0 %v314
        %354 = vmatpush.msra.mxu0 %v312
        %355 = vmatpush.msra.mxu0 %v310
        %356 = vmatmul.f32.gmra.mxu0 %v318
        %v357 = vpop.f32.mrf.mxu0
        %v358 = vadd.f32 0.0, %v357
        %359 = vdwg.mxu0
        %vm360 = vcmask 1040384
        %v361 = vsel %vm360, %v338, -inf
        %v362 = vsel %vm360, %v358, -inf
        %v363 = vmax.f32 %v361, %v362
        %364 = vmax.xlane.f32.xlu0 %v363
        %v365 = vpop.xlane.xlu0 %364
        %v366 = vsub.f32 %v338, %v365
        %v367 = vsub.f32 %v358, %v365
        %v368 = vmul.f32 %v366, 1.442695
        %v369 = vpow.pop %v368
        %v370 = vmul.f32 %v367, 1.442695
        %v371 = vpow.pop %v370
        %v372 = vsel %vm360, %v369, 0.0
        %v373 = vsel %vm360, %v371, 0.0
        %v374 = vadd.f32 %v372, %v373
        %375 = vadd.xlane.f32.xlu0 %v374
        %v376 = vpop.xlane.xlu0 %375
        %v377 = vrcp.pop %v376
        %v378 = vmul.f32 %v369, %v377
        %v379 = vmul.f32 %v371, %v377
        %v380 = vld [vmem:[%s4] sm:$0xff]
        %v381 = vld [vmem:[%s4 + $0x8] sm:$0xff]
        %v382 = vld [vmem:[%s4 + $0x10] sm:$0xff]
        %v383 = vld [vmem:[%s4 + $0x18] sm:$0xff]
        %v384 = vld [vmem:[%s4 + $0x20] sm:$0xff]
        %v385 = vld [vmem:[%s4 + $0x28] sm:$0xff]
        %v386 = vld [vmem:[%s4 + $0x30] sm:$0xff]
        %v387 = vld [vmem:[%s4 + $0x38] sm:$0xff]
        %v388 = vld [vmem:[%s4 + $0x40] sm:$0xff]
        %v389 = vld [vmem:[%s4 + $0x48] sm:$0xff]
        %v390 = vld [vmem:[%s4 + $0x50] sm:$0xff]
        %v391 = vld [vmem:[%s4 + $0x58] sm:$0xff]
        %v392 = vld [vmem:[%s4 + $0x60] sm:$0xff]
        %v393 = vld [vmem:[%s4 + $0x68] sm:$0xff]
        %v394 = vld [vmem:[%s4 + $0x70] sm:$0xff]
        %v395 = vld [vmem:[%s4 + $0x78] sm:$0xff]
        %v396 = vld [vmem:[%s4 + $0x80] sm:$0xff]
        %v397 = vld [vmem:[%s4 + $0x88] sm:$0xff]
        %v398 = vld [vmem:[%s4 + $0x90] sm:$0xff]
        %v399 = vld [vmem:[%s4 + $0x98] sm:$0xff]
        %v400 = vld [vmem:[%s4 + $0xa0] sm:$0xff]
        %v401 = vld [vmem:[%s4 + $0xa8] sm:$0xff]
        %v402 = vld [vmem:[%s4 + $0xb0] sm:$0xff]
        %v403 = vld [vmem:[%s4 + $0xb8] sm:$0xff]
        %v404 = vld [vmem:[%s4 + $0xc0] sm:$0xff]
        %v405 = vld [vmem:[%s4 + $0xc8] sm:$0xff]
        %v406 = vld [vmem:[%s4 + $0xd0] sm:$0xff]
        %v407 = vld [vmem:[%s4 + $0xd8] sm:$0xff]
        %v408 = vld [vmem:[%s4 + $0xe0] sm:$0xff]
        %v409 = vld [vmem:[%s4 + $0xe8] sm:$0xff]
        %v410 = vld [vmem:[%s4 + $0xf0] sm:$0xff]
        %v411 = vld [vmem:[%s4 + $0xf8] sm:$0xff]
        %412 = vmatpush.msra.mxu0 %v395
        %413 = vmatpush.msra.mxu0 %v394
        %414 = vmatpush.msra.mxu0 %v393
        %415 = vmatpush.msra.mxu0 %v392
        %416 = vmatpush.msra.mxu0 %v391
        %417 = vmatpush.msra.mxu0 %v390
        %418 = vmatpush.msra.mxu0 %v389
        %419 = vmatpush.msra.mxu0 %v388
        %420 = vmatpush.msra.mxu0 %v387
        %421 = vmatpush.msra.mxu0 %v386
        %422 = vmatpush.msra.mxu0 %v385
        %423 = vmatpush.msra.mxu0 %v384
        %424 = vmatpush.msra.mxu0 %v383
        %425 = vmatpush.msra.mxu0 %v382
        %426 = vmatpush.msra.mxu0 %v381
        %427 = vmatpush.msra.mxu0 %v380
        %428 = vmatmul.f32.gmra.mxu0 %v378
        %v429 = vpop.f32.mrf.mxu0
        %v430 = vadd.f32 0.0, %v429
        %431 = vdwg.mxu0
        %432 = vmatpush.msra.mxu0 %v411
        %433 = vmatpush.msra.mxu0 %v410
        %434 = vmatpush.msra.mxu0 %v409
        %435 = vmatpush.msra.mxu0 %v408
        %436 = vmatpush.msra.mxu0 %v407
        %437 = vmatpush.msra.mxu0 %v406
        %438 = vmatpush.msra.mxu0 %v405
        %439 = vmatpush.msra.mxu0 %v404
        %440 = vmatpush.msra.mxu0 %v403
        %441 = vmatpush.msra.mxu0 %v402
        %442 = vmatpush.msra.mxu0 %v401
        %443 = vmatpush.msra.mxu0 %v400
        %444 = vmatpush.msra.mxu0 %v399
        %445 = vmatpush.msra.mxu0 %v398
        %446 = vmatpush.msra.mxu0 %v397
        %447 = vmatpush.msra.mxu0 %v396
        %448 = vmatmul.f32.gmra.mxu0 %v379
        %v449 = vpop.f32.mrf.mxu0
        %v450 = vadd.f32 %v430, %v449
        %451 = vdwg.mxu0
        %vm452 = vcmask 24576
        %453 = vst.msk [vmem:[%s216] sm:$0x1] %vm452, %v450
        %s454 = sand.u32 %s137, 1
        %s455 = scalar_lea.sflag [#allocation3], %s454
        %s456 = sand.u32 %s137, 1
        %s457 = scalar_lea.vmem [#allocation2], %s456
        // Predicated region
        $region41: #{onehot2d_attention.1} parent=39 // pred_check
          %p458 = pneg %p147
        $region42: #{onehot2d_attention.1} parent=39 // pred_check_branch
          %460 = sbr.rel (%p458) target = $region44
        $region43: #{onehot2d_attention.1} parent=39 // pred_region
          %462 = vsyncadd %s455, 0
          %s463 = scalar_lea.hbm %s5, %s19
          %s465 = sshll.u32 %s457, 4
          %s466 = int_to_ptr.vmem [resolvable:$true] %s465
          %s467 = sshll.u32 %s463, 4
          %s468 = int_to_ptr.hbm [resolvable:$true] %s467
          %470 = dma.vmem_to_hbm [thread:$0]  %s466, 16, %s468, %s455
        $region44: #{onehot2d_attention.1} parent=39 // pred_fallthru
          _
      $region40: #{onehot2d_attention.1} parent=5 // pred_fallthru
        _
      %p471 = scmp.le.s32.totalorder 2, %s14
      // Predicated region
      $region45: #{onehot2d_attention.1} parent=5 // pred_check
        %p472 = pneg %p471
      $region46: #{onehot2d_attention.1} parent=5 // pred_check_branch
        %474 = sbr.rel (%p472) target = $region48
      $region47: #{onehot2d_attention.1} parent=5 // pred_region
        %s475 = ssub.s32 %s14, 2
        // Predicated region
        $region49: #{onehot2d_attention.1} parent=47 // pred_check
          %p476 = pneg %p153
        $region50: #{onehot2d_attention.1} parent=47 // pred_check_branch
          %478 = sbr.rel (%p476) target = $region52
        $region51: #{onehot2d_attention.1} parent=47 // pred_region
          %s479 = sand.u32 %s138, 1
          %s480 = scalar_lea.sflag [#allocation3], %s479
          %s481 = sand.u32 %s138, 1
          %s482 = scalar_lea.vmem [#allocation2], %s481
          %484 = dma.done %s480, 16
        $region52: #{onehot2d_attention.1} parent=47 // pred_fallthru
          _
      $region48: #{onehot2d_attention.1} parent=5 // pred_fallthru
        _
    $region6: #{onehot2d_attention.1} parent=1 // loop_footer
      %s18 = sadd.s32 1, %s14
    $region7: #{onehot2d_attention.1} parent=1 // loop_footer_branch
      %13 = sbr.rel target = $region3
    $region8: #{onehot2d_attention.1} parent=1 // loop_exit
      _
    %485 = vsyncpa [#allocation3], 1
    %s486 = scalar_lea.sflag [#allocation3], 1
    %487 = vsyncpa %s486, 1

</llo_original>
